<compile_context>
chip_gen: v7x
topology: tpu7x:2x2x1
jax: 0.10.0
libtpu: 0.0.40
codegen_flags: <defaults>
</compile_context>

<pallas_src>
import jax
import jax.numpy as jnp
from jax.experimental import pallas as pl
from jax.experimental.pallas import tpu as pltpu

_LANES = 128
# ~0.5 MiB per block buffer => (in + out) x double-buffering ~= 2 MiB VMEM,
# comfortably under the scoped-VMEM defaults on v5e (16 MiB), v6e (32 MiB) and
# v7x (32 MiB scoped / 64 MiB physical), while 1024x128 f32 blocks already sit
# near the measured HBM copy roofline (~85-86%).
_TARGET_BLOCK_BYTES = 512 * 1024


def _copy_kernel(x_ref, o_ref):
    # The pixel shuffle is a contiguous reshape: each block is already in its
    # final byte order, so the body is a straight copy (no slices/concats, no
    # XLU work, no masked stores).
    o_ref[...] = x_ref[...]


def pixel_shuffle_1d(x, upscale_factor):
    """Pallas implementation of PixelShuffle1D.forward."""
    b, c, t = x.shape
    if c % upscale_factor != 0:
        raise ValueError("Input channel length must be divisible by upscale factor")
    c_out = c // upscale_factor
    t_out = t * upscale_factor
    out_shape = (b, c_out, t_out)
    itemsize = jnp.dtype(x.dtype).itemsize
    total = b * c * t

    if total % _LANES == 0:
        # Lane-dense path: view the whole tensor as (rows, 128) and stream it
        # through in ~0.5 MiB blocks. Many grid steps keep input/output DMAs
        # pipelined and give the v7x megacore a parallel axis to split; every
        # store is a full-width (unmasked) 128-lane vst.
        rows = total // _LANES
        max_rows = max(8, (_TARGET_BLOCK_BYTES // (_LANES * itemsize)) // 8 * 8)
        block_rows = rows if rows <= max_rows else max_rows
        grid = (pl.cdiv(rows, block_rows),)
        spec = pl.BlockSpec((block_rows, _LANES), lambda i: (i, 0))
        x2d = x.reshape(rows, _LANES)
        out2d = pl.pallas_call(
            _copy_kernel,
            out_shape=jax.ShapeDtypeStruct((rows, _LANES), x.dtype),
            grid=grid,
            in_specs=[spec],
            out_specs=spec,
            # Input and output are byte-identical, so let XLA alias the
            # buffers when it can (kernel becomes a near no-op).
            input_output_aliases={0: 0},
            compiler_params=pltpu.CompilerParams(
                dimension_semantics=("parallel",),
            ),
        )(x2d)
        return out2d.reshape(out_shape)

    # Fallback when the flat size is not lane-aligned: do the (free) reshape
    # outside the kernel and copy one batch element per grid step using
    # full-extent blocks (satisfies the (8,128) rule via the full-dims case).
    # TODO(synk): chunk very large C*T in this fallback to stay under scoped VMEM.
    x3d = x.reshape(out_shape)
    spec = pl.BlockSpec((1, c_out, t_out), lambda i: (i, 0, 0))
    out3d = pl.pallas_call(
        _copy_kernel,
        out_shape=jax.ShapeDtypeStruct(out_shape, x.dtype),
        grid=(b,),
        in_specs=[spec],
        out_specs=spec,
        input_output_aliases={0: 0},
        compiler_params=pltpu.CompilerParams(
            dimension_semantics=("parallel",),
        ),
    )(x3d)
    return out3d


if __name__ == "__main__":
    key = jax.random.PRNGKey(0)
    B, C, T = 2, 4, 16
    upscale_factor = 2

    x = jax.random.normal(key, (B, C, T), dtype=jnp.float32)

    out = pixel_shuffle_1d(x, upscale_factor)
    out = jax.block_until_ready(out)

    # Reference: plain row-major reshape (exactly what the PyTorch module does).
    ref = jnp.reshape(x, (B, C // upscale_factor, T * upscale_factor))

    assert out.shape == (B, C // upscale_factor, T * upscale_factor), out.shape
    assert out.dtype == x.dtype
    assert jnp.array_equal(out, ref), "Pallas output does not match reference reshape"

    print("KERNEL_OK")
</pallas_src>

<mosaic_0001>
module attributes {stable_mosaic.version = 11 : i64} {
  func.func @_copy_kernel(%arg0: i32, %arg1: memref<1x128xf32, #tpu.memory_space<vmem>>, %arg2: memref<1x128xf32, #tpu.memory_space<vmem>>) attributes {dimension_semantics = [#tpu.dimension_semantics<parallel>], iteration_bounds = array<i64: 1>, scalar_prefetch = 0 : i64, scratch_operands = 0 : i64, tpu.core_type = #tpu.core_type<tc>, window_params = [{transform_indices = @transform_0, window_bounds = array<i64: 1, 128>}, {transform_indices = @transform_1, window_bounds = array<i64: 1, 128>}]} {
    %c0 = arith.constant 0 : index
    %c0_0 = arith.constant 0 : index
    %0 = vector.load %arg1[%c0, %c0_0] : memref<1x128xf32, #tpu.memory_space<vmem>>, vector<1x128xf32>
    %c0_1 = arith.constant 0 : index
    %c0_2 = arith.constant 0 : index
    %1 = vector.load %arg2[%c0_1, %c0_2] : memref<1x128xf32, #tpu.memory_space<vmem>>, vector<1x128xf32>
    tpu.vector_store %arg2[%c0_1, %c0_2], %0 {strides = array<i32>} : memref<1x128xf32, #tpu.memory_space<vmem>>, vector<1x128xf32>,
    return
  }
  func.func @transform_0(%arg0: i32) -> (i32, i32) {
    %c0_i32 = arith.constant 0 : i32
    %c0_i32_0 = arith.constant 0 : i32
    return %arg0, %c0_i32 : i32, i32
  }
  func.func @transform_1(%arg0: i32) -> (i32, i32) {
    %c0_i32 = arith.constant 0 : i32
    %c0_i32_0 = arith.constant 0 : i32
    return %arg0, %c0_i32 : i32, i32
  }
}

</mosaic_0001>

<llo_original>
// kernel: tpu_custom_call.1
$region0: #{tpu_custom_call.1}
  #allocation0 [shape = 'u32[]', space=smem, size = 0x4, offset = 0x4, fixed_abs, tag = 'smem constant byte address 0x4 - core index']
  #allocation1 [shape = 'u32[144,128]{1,0:T(1,128)}', space=vmem, size = 0x12000, scoped, tag = 'internal scratch']
  %s0 = inlined_call_operand.hbm [shape: f32[1,128], index: 0, kind: input, shape index: {}, may-alias: {0,1}]
  %s1 = inlined_call_operand.hbm [shape: f32[1,128], index: 1, kind: output, shape index: {}, may-alias: {0,1}]
  %s2 = sld [smem:[#allocation0]]
  $region18: #{tpu_custom_call.1} parent=0
    _
  %s4 = ssub.s32 1, %s2
  %s5 = scalar_select 0, %s4, %s2
  $region1: #{tpu_custom_call.1} parent=0
    #allocation2 [shape = 'u8[512]{0}', space=vmem, size = 0x400, scoped, tag = 'input window, operand 0, single buffered']
    #allocation3 [shape = 's32[1]{0}', space=sflag, size = 0x4, scoped, tag = 'scoped memory for tpu_custom_call.1']
    #allocation4 [shape = 's32[1]{0}', space=sflag, size = 0x4, scoped, tag = 'scoped memory for tpu_custom_call.1']
    #allocation5 [shape = 'u8[512]{0}', space=vmem, size = 0x400, scoped, tag = 'output window, operand 0, single buffered']
    %6 = vsyncpa [#allocation3], 0
    %7 = vsyncpa [#allocation4], 0
    // Predicated region
    $region2: #{tpu_custom_call.1} parent=1 // pred_check
      _
    $region3: #{tpu_custom_call.1} parent=1 // pred_check_branch
      %9 = sbr.rel (0) target = $region5
    $region4: #{tpu_custom_call.1} parent=1 // pred_region
      %s11 = ssub.s32 16, 16
      %12 = vsyncadd [#allocation3], %s11
      %s14 = sshll.u32 [#allocation2], 4
      %s15 = int_to_ptr.vmem [resolvable:$true] %s14
      %17 = dma.hbm_to_vmem [thread:$0]  %s0, 16, %s15, [#allocation3]
    $region5: #{tpu_custom_call.1} parent=1 // pred_fallthru
      _
    // Predicated region
    $region6: #{tpu_custom_call.1} parent=1 // pred_check
      _
    $region7: #{tpu_custom_call.1} parent=1 // pred_check_branch
      %19 = sbr.rel (0) target = $region9
    $region8: #{tpu_custom_call.1} parent=1 // pred_region
      %20 = dma.done [#allocation3], 16
    $region9: #{tpu_custom_call.1} parent=1 // pred_fallthru
      _
    %v21 = vld [vmem:[#allocation2] sm:$0x1]
    %22 = vst [vmem:[#allocation5] sm:$0x1] %v21
    // Predicated region
    $region10: #{tpu_custom_call.1} parent=1 // pred_check
      _
    $region11: #{tpu_custom_call.1} parent=1 // pred_check_branch
      %24 = sbr.rel (0) target = $region13
    $region12: #{tpu_custom_call.1} parent=1 // pred_region
      %s26 = ssub.s32 16, 16
      %27 = vsyncadd [#allocation4], %s26
      %s29 = sshll.u32 [#allocation5], 4
      %s30 = int_to_ptr.vmem [resolvable:$true] %s29
      %32 = dma.vmem_to_hbm [thread:$0]  %s30, 16, %s1, [#allocation4]
    $region13: #{tpu_custom_call.1} parent=1 // pred_fallthru
      _
    // Predicated region
    $region14: #{tpu_custom_call.1} parent=1 // pred_check
      _
    $region15: #{tpu_custom_call.1} parent=1 // pred_check_branch
      %34 = sbr.rel (0) target = $region17
    $region16: #{tpu_custom_call.1} parent=1 // pred_region
      %35 = dma.done [#allocation4], 16
    $region17: #{tpu_custom_call.1} parent=1 // pred_fallthru
      _
    %36 = vsyncpa [#allocation3], 1
    %37 = vsyncpa [#allocation4], 1

</llo_original>
